<compile_context>
chip_gen: v6e
topology: v6e:2x2x1
jax: 0.10.0
libtpu: 0.0.40
codegen_flags: <defaults>
</compile_context>

<pallas_src>
import jax
import jax.numpy as jnp
from jax.experimental import pallas as pl
from jax.experimental.pallas import tpu as pltpu


# ----------------------------------------------------------------------------- kernel ---------
def _linear_seq_attn_kernel(x_ref, mask_ref, w_ref, b_ref, out_ref):
    # x_ref   : (TB, L, H)   input dtype (f32 or bf16)
    # mask_ref: (TB, 1, L)   int8 (nonzero = padding)
    # w_ref   : (1, H)       nn.Linear(H, 1).weight (VMEM-resident)
    # b_ref   : (1,)         f32 bias in SMEM
    # out_ref : (TB, 1, L)   f32 softmax weights
    tb, l, h = x_ref.shape

    # Linear(H, 1): VPU multiply (kept in the input dtype) + f32-accumulated lane reduce.
    # Chunk the H reduction with static ref slices so large tiles never hold a full
    # (TB, L, H) f32 temporary (bounds vreg pressure on a mem-bound kernel).
    ch = h
    for cand in (512, 256, 128):
        if h % cand == 0:
            ch = cand
            break

    scores = jnp.zeros((tb, l), dtype=jnp.float32)
    for c0 in range(0, h, ch):
        xc = x_ref[:, :, c0:c0 + ch]                               # (TB, L, ch), input dtype
        wc = w_ref[:, c0:c0 + ch].astype(xc.dtype).reshape(1, 1, ch)
        scores = scores + jnp.sum(xc * wc, axis=-1, dtype=jnp.float32)
    scores = scores + b_ref[0]

    # masked_fill_(mask == 1, -inf): finite sentinel so a fully-masked row yields a uniform
    # distribution instead of NaN (deliberate, documented divergence from PyTorch).
    is_pad = mask_ref[...].reshape(tb, l).astype(jnp.int32) != 0
    scores = jnp.where(is_pad, jnp.float32(-1e30), scores)

    # Softmax over the sequence axis.
    m = jnp.max(scores, axis=-1, keepdims=True)
    e = jnp.exp(scores - m)
    s = jnp.sum(e, axis=-1, keepdims=True)
    # EUP approx reciprocal + one Newton step (~f32-exact) instead of a VPU divide.
    r = pl.reciprocal(s, approx=True)
    r = r * (jnp.float32(2.0) - s * r)

    # Single store of the whole block (unmasked lane-dense vst whenever L % 128 == 0).
    out_ref[...] = (e * r).reshape(tb, 1, l)


# ----------------------------------------------------------------------------- wrapper --------
def _device_vmem_bytes():
    """Per-core VMEM capacity; falls back to v7x's 64 MiB (the most restrictive chip)."""
    try:
        info = pltpu.get_tpu_info()
        for attr in ("vmem_capacity_bytes", "vmem_size_bytes", "vmem_bytes"):
            v = getattr(info, attr, None)
            if v:
                return int(v)
    except Exception:
        pass
    return 64 * 1024 * 1024


def _pick_block_b(batch, seq_len, hidden, x_itemsize, vmem_bytes):
    # Bytes of one batch row in one pipeline buffer (x dominates; + i8 mask + f32 out).
    per_row = seq_len * hidden * x_itemsize + seq_len * (1 + 4)
    # ~VMEM/6 per buffer: double-buffered x (2x) + mask/out buffers + headroom.
    # v7x (64 MiB/TC) -> ~10.7 MiB/buffer; v5e/v6e (128 MiB) -> ~21 MiB/buffer.
    budget = max(per_row, vmem_bytes // 6)
    tb = max(1, min(batch, budget // per_row))
    # Keep >= min(B, 4) grid steps so the pipeline has DMAs to hide behind compute and
    # both v7x TensorCores get tiles on the "parallel" batch axis.
    tb = min(tb, max(1, batch // min(batch, 4)))
    # Prefer an even number of grid steps (v7x shards the parallel axis across 2 TCs).
    while tb > 1 and pl.cdiv(batch, tb) % 2 == 1:
        tb -= 1
    return int(tb)
    # Note: for extreme L*H where even a single batch row exceeds VMEM, an inner
    # H-reduction grid axis would be required; not needed for this module's shapes.


def linear_seq_attn(x, x_mask, weight, bias, *, block_b=None):
    """x: (B, L, H), x_mask: (B, L) (nonzero = pad), weight: (1, H), bias: (1,).

    Returns alpha: (B, L) float32, softmax over L of Linear(H, 1)(x) with padding masked.
    """
    B, L, H = x.shape
    vmem_bytes = _device_vmem_bytes()
    if block_b is None:
        block_b = _pick_block_b(B, L, H, x.dtype.itemsize, vmem_bytes)
    TB = int(block_b)

    # int8 mask (4x less HBM/VMEM traffic); (B, 1, L) so TB is a leading block dim
    # (exempt from the multiple-of-8 sublane rule -> TB may be 1).
    mask_i8 = (jnp.asarray(x_mask) != 0).astype(jnp.int8).reshape(B, 1, L)
    weight = jnp.asarray(weight).reshape(1, H)
    bias_smem = jnp.asarray(bias, dtype=jnp.float32).reshape(1)

    vmem_limit = int(min(vmem_bytes * 3 // 4, 96 * 1024 * 1024))

    out = pl.pallas_call(
        _linear_seq_attn_kernel,
        out_shape=jax.ShapeDtypeStruct((B, 1, L), jnp.float32),
        grid=(pl.cdiv(B, TB),),
        in_specs=[
            pl.BlockSpec((TB, L, H), lambda i: (i, 0, 0)),        # x: batch-tiled
            pl.BlockSpec((TB, 1, L), lambda i: (i, 0, 0)),        # mask: batch-tiled, int8
            pl.BlockSpec((1, H), lambda i: (0, 0)),               # weight: VMEM-resident
            pl.BlockSpec(memory_space=pltpu.MemorySpace.SMEM),    # bias: scalar in SMEM
        ],
        out_specs=pl.BlockSpec((TB, 1, L), lambda i: (i, 0, 0)),
        compiler_params=pltpu.CompilerParams(
            dimension_semantics=("parallel",),   # independent batch tiles (2 TCs on v7x)
            vmem_limit_bytes=vmem_limit,
        ),
    )(x, mask_i8, weight, bias_smem)

    return out.reshape(B, L)


# ----------------------------------------------------------------------------- reference ------
def _reference(x, x_mask, weight, bias):
    w = jnp.asarray(weight, jnp.float32).reshape(-1)
    scores = jnp.einsum("blh,h->bl", x.astype(jnp.float32), w) + jnp.asarray(bias, jnp.float32)[0]
    scores = jnp.where(x_mask != 0, -jnp.inf, scores)
    return jax.nn.softmax(scores, axis=-1)


# ----------------------------------------------------------------------------- test -----------
if __name__ == "__main__":
    root = jax.random.PRNGKey(0)

    def make_case(seed, B, L, H, dtype):
        kx, kw, kb = jax.random.split(jax.random.fold_in(root, seed), 3)
        x = jax.random.normal(kx, (B, L, H), dtype=jnp.float32).astype(dtype)
        mask = jnp.zeros((B, L), dtype=jnp.int32)
        mask = mask.at[0, L // 2:].set(1)            # pad the tail of a few rows
        if B > 1:
            mask = mask.at[1, L - 1:].set(1)
        if B > 3:
            mask = mask.at[3, 1:L // 3 + 1].set(1)
        bound = 1.0 / float(H) ** 0.5                # nn.Linear(H, 1) init bounds
        w = jax.random.uniform(kw, (1, H), minval=-bound, maxval=bound, dtype=jnp.float32)
        b = jax.random.uniform(kb, (1,), minval=-bound, maxval=bound, dtype=jnp.float32)
        return x, mask, w, b

    # Case 1: module-sized small shapes. Auto tiling (TB=4, 4-step grid), a ragged split
    # (B % TB != 0), and a forced single-step grid.
    B, L, H = 16, 8, 32
    x, mask, w, b = make_case(1, B, L, H, jnp.float32)
    ref = _reference(x, mask, w, b)
    for blk in (None, 3, B):
        alpha = jax.block_until_ready(linear_seq_attn(x, mask, w, b, block_b=blk))
        assert alpha.shape == (B, L)
        assert jnp.allclose(alpha, ref, atol=1e-5, rtol=1e-5), (blk, float(jnp.max(jnp.abs(alpha - ref))))
        assert jnp.allclose(jnp.sum(alpha, axis=-1), jnp.ones((B,)), atol=1e-5)

    # Case 2: lane-dense L (multiple of 128) and a multi-chunk H reduction (384 = 3 x 128), f32.
    B, L, H = 4, 128, 384
    x, mask, w, b = make_case(2, B, L, H, jnp.float32)
    ref = _reference(x, mask, w, b)
    alpha = jax.block_until_ready(linear_seq_attn(x, mask, w, b))
    assert jnp.allclose(alpha, ref, atol=1e-5, rtol=1e-5), float(jnp.max(jnp.abs(alpha - ref)))

    # Case 3: bf16 activations (bf16 VPU multiply, f32 accumulate) — looser tolerance.
    B, L, H = 2, 40, 384
    x, mask, w, b = make_case(3, B, L, H, jnp.bfloat16)
    ref = _reference(x, mask, w, b)
    alpha = jax.block_until_ready(linear_seq_attn(x, mask, w, b))
    assert jnp.allclose(alpha, ref, atol=2e-2, rtol=2e-2), float(jnp.max(jnp.abs(alpha - ref)))

    print("KERNEL_OK")
</pallas_src>

<mosaic_0001>
module attributes {stable_mosaic.version = 11 : i64} {
  func.func @_linear_seq_attn_kernel(%arg0: i32, %arg1: memref<4x8x32xf32, #tpu.memory_space<vmem>>, %arg2: memref<4x1x8xi8, #tpu.memory_space<vmem>>, %arg3: memref<1x32xf32, #tpu.memory_space<vmem>>, %arg4: memref<1xf32, #tpu.memory_space<smem>>, %arg5: memref<4x1x8xf32, #tpu.memory_space<vmem>>) attributes {dimension_semantics = [#tpu.dimension_semantics<parallel>], iteration_bounds = array<i64: 4>, scalar_prefetch = 0 : i64, scratch_operands = 0 : i64, tpu.core_type = #tpu.core_type<tc>, window_params = [{transform_indices = @transform_0, window_bounds = array<i64: 4, 8, 32>}, {transform_indices = @transform_1, window_bounds = array<i64: 4, 1, 8>}, {pipeline_mode = #tpu.pipeline_mode<synchronous>, transform_indices = @transform_2, window_bounds = array<i64: 1, 32>}, {transform_indices = @transform_3, window_bounds = array<i64: 1>}, {transform_indices = @transform_4, window_bounds = array<i64: 4, 1, 8>}]} {
    %cst = arith.constant 0.000000e+00 : f32
    %0 = vector.broadcast %cst : f32 to vector<4x8xf32>
    %c0 = arith.constant 0 : index
    %c0_0 = arith.constant 0 : index
    %c0_1 = arith.constant 0 : index
    %1 = vector.load %arg1[%c0, %c0_0, %c0_1] : memref<4x8x32xf32, #tpu.memory_space<vmem>>, vector<4x8x32xf32>
    %c0_2 = arith.constant 0 : index
    %c0_3 = arith.constant 0 : index
    %2 = vector.load %arg3[%c0_2, %c0_3] : memref<1x32xf32, #tpu.memory_space<vmem>>, vector<1x32xf32>
    %3 = vector.shape_cast %2 : vector<1x32xf32> to vector<1x1x32xf32>
    %4 = vector.broadcast %3 : vector<1x1x32xf32> to vector<4x8x32xf32>
    %5 = arith.mulf %1, %4 : vector<4x8x32xf32>
    %cst_4 = arith.constant dense<0.000000e+00> : vector<4x8xf32>
    %6 = vector.multi_reduction <add>, %5, %cst_4 [2] : vector<4x8x32xf32> to vector<4x8xf32>
    %7 = arith.addf %0, %6 : vector<4x8xf32>
    %c0_5 = arith.constant 0 : index
    %8 = memref.load %arg4[%c0_5] : memref<1xf32, #tpu.memory_space<smem>>
    %9 = vector.broadcast %8 : f32 to vector<4x8xf32>
    %10 = arith.addf %7, %9 : vector<4x8xf32>
    %c0_6 = arith.constant 0 : index
    %c0_7 = arith.constant 0 : index
    %c0_8 = arith.constant 0 : index
    %11 = vector.load %arg2[%c0_6, %c0_7, %c0_8] : memref<4x1x8xi8, #tpu.memory_space<vmem>>, vector<4x1x8xi8>
    %12 = vector.shape_cast %11 : vector<4x1x8xi8> to vector<4x8xi8>
    %13 = arith.extsi %12 : vector<4x8xi8> to vector<4x8xi32>
    %c0_i32 = arith.constant 0 : i32
    %14 = vector.broadcast %c0_i32 : i32 to vector<4x8xi32>
    %15 = arith.cmpi ne, %13, %14 : vector<4x8xi32>
    %cst_9 = arith.constant -1.000000e+30 : f32
    %16 = vector.broadcast %cst_9 : f32 to vector<4x8xf32>
    %17 = arith.select %15, %16, %10 : vector<4x8xi1>, vector<4x8xf32>
    %cst_10 = arith.constant dense<0xFF800000> : vector<4xf32>
    %18 = vector.multi_reduction <maximumf>, %17, %cst_10 [1] : vector<4x8xf32> to vector<4xf32>
    %19 = vector.shape_cast %18 : vector<4xf32> to vector<4x1xf32>
    %20 = vector.broadcast %19 : vector<4x1xf32> to vector<4x8xf32>
    %21 = arith.subf %17, %20 : vector<4x8xf32>
    %22 = math.exp %21 : vector<4x8xf32>
    %cst_11 = arith.constant dense<0.000000e+00> : vector<4xf32>
    %23 = vector.multi_reduction <add>, %22, %cst_11 [1] : vector<4x8xf32> to vector<4xf32>
    %24 = vector.shape_cast %23 : vector<4xf32> to vector<4x1xf32>
    %25 = tpu.reciprocal %24 {approx = true} : vector<4x1xf32> -> vector<4x1xf32>
    %26 = arith.mulf %24, %25 : vector<4x1xf32>
    %cst_12 = arith.constant 2.000000e+00 : f32
    %27 = vector.broadcast %cst_12 : f32 to vector<4x1xf32>
    %28 = arith.subf %27, %26 : vector<4x1xf32>
    %29 = arith.mulf %25, %28 : vector<4x1xf32>
    %30 = vector.broadcast %29 : vector<4x1xf32> to vector<4x8xf32>
    %31 = arith.mulf %22, %30 : vector<4x8xf32>
    %32 = vector.shape_cast %31 : vector<4x8xf32> to vector<4x1x8xf32>
    %c0_13 = arith.constant 0 : index
    %c0_14 = arith.constant 0 : index
    %c0_15 = arith.constant 0 : index
    %33 = vector.load %arg5[%c0_13, %c0_14, %c0_15] : memref<4x1x8xf32, #tpu.memory_space<vmem>>, vector<4x1x8xf32>
    tpu.vector_store %arg5[%c0_13, %c0_14, %c0_15], %32 {strides = array<i32>} : memref<4x1x8xf32, #tpu.memory_space<vmem>>, vector<4x1x8xf32>,
    return
  }
  func.func @transform_0(%arg0: i32) -> (i32, i32, i32) {
    %c0_i32 = arith.constant 0 : i32
    %c0_i32_0 = arith.constant 0 : i32
    %c0_i32_1 = arith.constant 0 : i32
    return %arg0, %c0_i32, %c0_i32_0 : i32, i32, i32
  }
  func.func @transform_1(%arg0: i32) -> (i32, i32, i32) {
    %c0_i32 = arith.constant 0 : i32
    %c0_i32_0 = arith.constant 0 : i32
    %c0_i32_1 = arith.constant 0 : i32
    return %arg0, %c0_i32, %c0_i32_0 : i32, i32, i32
  }
  func.func @transform_2(%arg0: i32) -> (i32, i32) {
    %c0_i32 = arith.constant 0 : i32
    %c0_i32_0 = arith.constant 0 : i32
    %c0_i32_1 = arith.constant 0 : i32
    return %c0_i32, %c0_i32_0 : i32, i32
  }
  func.func @transform_3(%arg0: i32) -> i32 {
    %c0_i32 = arith.constant 0 : i32
    %c0_i32_0 = arith.constant 0 : i32
    return %c0_i32 : i32
  }
  func.func @transform_4(%arg0: i32) -> (i32, i32, i32) {
    %c0_i32 = arith.constant 0 : i32
    %c0_i32_0 = arith.constant 0 : i32
    %c0_i32_1 = arith.constant 0 : i32
    return %arg0, %c0_i32, %c0_i32_0 : i32, i32, i32
  }
}

</mosaic_0001>

<llo_original>
// kernel: tpu_custom_call.1
$region0: #{tpu_custom_call.1}
  #allocation0 [shape = 'u32[]', space=smem, size = 0x4, offset = 0x4, fixed_abs, tag = 'smem constant byte address 0x4 - core index']
  #allocation1 [shape = 'u32[144,128]{1,0:T(1,128)}', space=vmem, size = 0x12000, scoped, tag = 'internal scratch']
  #allocation2 [shape = 'f32[1]{0:T(128)S(6)}', space=smem, size = 0x200, scoped, tag = 'scoped memory for tpu_custom_call.1']
  %s0 = inlined_call_operand.hbm [shape: f32[16,8,32], index: 0, kind: input, shape index: {}]
  %s1 = inlined_call_operand.vmem [shape: s8[16,1,8], index: 1, kind: input, shape index: {}]
  %s2 = inlined_call_operand.vmem [shape: f32[1,32], index: 2, kind: input, shape index: {}]
  %s3 = inlined_call_operand.<no memory space> [shape: f32[1], index: 3, kind: input, shape index: {}]
  %s4 = inlined_call_operand.vmem [shape: f32[16,1,8], index: 4, kind: output, shape index: {}]
  %s5 = sld [smem:[#allocation0]]
  $region53: #{tpu_custom_call.1} parent=0
    _
  %s7 = ssub.s32 1, %s5
  %s8 = scalar_select 0, %s7, %s5
  %9 = sst [smem:[#allocation2]] %s3
  $region1: #{tpu_custom_call.1} parent=0
    #allocation3 [shape = 'u8[32768]{0}', space=vmem, size = 0x8000, scoped, tag = 'input window, operand 0']
    #allocation4 [shape = 's32[2]{0}', space=sflag, size = 0x8, scoped, tag = 'scoped memory for tpu_custom_call.1']
    %10 = vsyncpa [#allocation4], 0
    %s11 = scalar_lea.sflag [#allocation4], 1
    %12 = vsyncpa %s11, 0
    loop: start=0, step=1, limit=6
    $region2: #{tpu_custom_call.1} parent=1 // loop_pre_header
      _
    $region3: #{tpu_custom_call.1} parent=1 // loop_header
      %s14 = sphi 0, %s18
      %p15 = scmp.ge.s32.totalorder %s14, 6
      %s24 = sphi 0, %s26
      %s27 = sphi 0, %s24
      %s28 = sphi 0, %s27
      %s44 = sphi 0, %s28
      %s50 = sphi 0, %s52
      %s53 = sphi 0, %s50
      %s54 = sphi 0, %s53
      %s70 = sphi 0, %s54
      %s74 = sphi 0, %s74
      %s76 = sphi 0, %s74
      %s77 = sphi 0, %s76
      %s91 = sphi 0, %s77
      %s95 = sphi 0, %s95
      %s97 = sphi 0, %s95
      %s98 = sphi 0, %s97
      %s112 = sphi 0, %s98
      %s118 = sphi 0, %s120
      %s121 = sphi 0, %s118
      %s122 = sphi 0, %s121
      %s138 = sphi 0, %s122
    $region4: #{tpu_custom_call.1} parent=1 // loop_header_branch
      %17 = sbr.rel (%p15) target = $region8
    $region5: #{tpu_custom_call.1} parent=1 // loop_body
      %s19 = ssub.s32 %s14, 1
      %s20 = ssub.s32 %s14, 2
      %s21 = sadd.s32 %s14, 1
      %s22 = ssub.s32 %s14, %s21
      %p23 = scmp.eq.s32.totalorder %s22, 0
      %s25 = sadd.s32 %s24, 1
      %s26 = scalar_select %p23, %s24, %s25
      %p29 = pneg %p23
      %p30 = scmp.eq.s32.totalorder %s14, 3
      %p31 = por %p29, %p30
      %p32 = scmp.ne.s32.totalorder %s24, %s27
      %p33 = scmp.eq.s32.totalorder %s14, 0
      %p34 = por %p32, %p33
      %p35 = scmp.ne.s32.totalorder %s24, %s27
      %p36 = scmp.eq.s32.totalorder %s19, 3
      %p37 = por %p35, %p36
      %p38 = scmp.ne.s32.totalorder %s27, %s28
      %p39 = scmp.eq.s32.totalorder %s19, 0
      %p40 = por %p38, %p39
      %p41 = scmp.ne.s32.totalorder %s27, %s28
      %p42 = scmp.eq.s32.totalorder %s20, 3
      %p43 = por %p41, %p42
      %p45 = scmp.ne.s32.totalorder %s28, %s44
      %p46 = scmp.eq.s32.totalorder %s20, 0
      %p47 = por %p45, %p46
      %s48 = ssub.s32 %s14, %s21
      %p49 = scmp.eq.s32.totalorder %s48, 0
      %s51 = sadd.s32 %s50, 1
      %s52 = scalar_select %p49, %s50, %s51
      %p55 = pneg %p49
      %p56 = scmp.eq.s32.totalorder %s14, 3
      %p57 = por %p55, %p56
      %p58 = scmp.ne.s32.totalorder %s50, %s53
      %p59 = scmp.eq.s32.totalorder %s14, 0
      %p60 = por %p58, %p59
      %p61 = scmp.ne.s32.totalorder %s50, %s53
      %p62 = scmp.eq.s32.totalorder %s19, 3
      %p63 = por %p61, %p62
      %p64 = scmp.ne.s32.totalorder %s53, %s54
      %p65 = scmp.eq.s32.totalorder %s19, 0
      %p66 = por %p64, %p65
      %p67 = scmp.ne.s32.totalorder %s53, %s54
      %p68 = scmp.eq.s32.totalorder %s20, 3
      %p69 = por %p67, %p68
      %p71 = scmp.ne.s32.totalorder %s54, %s70
      %p72 = scmp.eq.s32.totalorder %s20, 0
      %p73 = por %p71, %p72
      %s75 = sadd.s32 %s74, 1
      %p78 = scmp.eq.s32.totalorder %s14, 3
      %p79 = scmp.ne.s32.totalorder %s74, %s76
      %p80 = scmp.eq.s32.totalorder %s14, 0
      %p81 = por %p79, %p80
      %p82 = scmp.ne.s32.totalorder %s74, %s76
      %p83 = scmp.eq.s32.totalorder %s19, 3
      %p84 = por %p82, %p83
      %p85 = scmp.ne.s32.totalorder %s76, %s77
      %p86 = scmp.eq.s32.totalorder %s19, 0
      %p87 = por %p85, %p86
      %p88 = scmp.ne.s32.totalorder %s76, %s77
      %p89 = scmp.eq.s32.totalorder %s20, 3
      %p90 = por %p88, %p89
      %p92 = scmp.ne.s32.totalorder %s77, %s91
      %p93 = scmp.eq.s32.totalorder %s20, 0
      %p94 = por %p92, %p93
      %s96 = sadd.s32 %s95, 1
      %p99 = scmp.eq.s32.totalorder %s14, 3
      %p100 = scmp.ne.s32.totalorder %s95, %s97
      %p101 = scmp.eq.s32.totalorder %s14, 0
      %p102 = por %p100, %p101
      %p103 = scmp.ne.s32.totalorder %s95, %s97
      %p104 = scmp.eq.s32.totalorder %s19, 3
      %p105 = por %p103, %p104
      %p106 = scmp.ne.s32.totalorder %s97, %s98
      %p107 = scmp.eq.s32.totalorder %s19, 0
      %p108 = por %p106, %p107
      %p109 = scmp.ne.s32.totalorder %s97, %s98
      %p110 = scmp.eq.s32.totalorder %s20, 3
      %p111 = por %p109, %p110
      %p113 = scmp.ne.s32.totalorder %s98, %s112
      %p114 = scmp.eq.s32.totalorder %s20, 0
      %p115 = por %p113, %p114
      %s116 = ssub.s32 %s14, %s21
      %p117 = scmp.eq.s32.totalorder %s116, 0
      %s119 = sadd.s32 %s118, 1
      %s120 = scalar_select %p117, %s118, %s119
      %p123 = pneg %p117
      %p124 = scmp.eq.s32.totalorder %s14, 3
      %p125 = por %p123, %p124
      %p126 = scmp.ne.s32.totalorder %s118, %s121
      %p127 = scmp.eq.s32.totalorder %s14, 0
      %p128 = por %p126, %p127
      %p129 = scmp.ne.s32.totalorder %s118, %s121
      %p130 = scmp.eq.s32.totalorder %s19, 3
      %p131 = por %p129, %p130
      %p132 = scmp.ne.s32.totalorder %s121, %s122
      %p133 = scmp.eq.s32.totalorder %s19, 0
      %p134 = por %p132, %p133
      %p135 = scmp.ne.s32.totalorder %s121, %s122
      %p136 = scmp.eq.s32.totalorder %s20, 3
      %p137 = por %p135, %p136
      %p139 = scmp.ne.s32.totalorder %s122, %s138
      %p140 = scmp.eq.s32.totalorder %s20, 0
      %p141 = por %p139, %p140
      %p142 = scmp.le.s32.totalorder 1, %s14
      %p143 = scmp.lt.s32.totalorder %s14, 5
      %p144 = pnand %p142, %p143
      %p145 = pneg %p144
      // Predicated region
      $region9: #{tpu_custom_call.1} parent=5 // pred_check
        _
      $region10: #{tpu_custom_call.1} parent=5 // pred_check_branch
        %147 = sbr.rel (%p144) target = $region12
      $region11: #{tpu_custom_call.1} parent=5 // pred_region
        %s148 = ssub.s32 %s14, 1
        // Predicated region
        $region13: #{tpu_custom_call.1} parent=11 // pred_check
          %p149 = pneg %p87
        $region14: #{tpu_custom_call.1} parent=11 // pred_check_branch
          %151 = sbr.rel (%p149) target = $region16
        $region15: #{tpu_custom_call.1} parent=11 // pred_region
          _
        $region16: #{tpu_custom_call.1} parent=11 // pred_fallthru
          _
        // Predicated region
        $region17: #{tpu_custom_call.1} parent=11 // pred_check
          %p152 = pneg %p108
        $region18: #{tpu_custom_call.1} parent=11 // pred_check_branch
          %154 = sbr.rel (%p152) target = $region20
        $region19: #{tpu_custom_call.1} parent=11 // pred_region
          _
        $region20: #{tpu_custom_call.1} parent=11 // pred_fallthru
          _
      $region12: #{tpu_custom_call.1} parent=5 // pred_fallthru
        _
      %p155 = scmp.lt.s32.totalorder %s14, 4
      // Predicated region
      $region21: #{tpu_custom_call.1} parent=5 // pred_check
        %p156 = pneg %p155
      $region22: #{tpu_custom_call.1} parent=5 // pred_check_branch
        %158 = sbr.rel (%p156) target = $region24
      $region23: #{tpu_custom_call.1} parent=5 // pred_region
        // Predicated region
        $region25: #{tpu_custom_call.1} parent=23 // pred_check
          %p159 = pneg %p34
        $region26: #{tpu_custom_call.1} parent=23 // pred_check_branch
          %161 = sbr.rel (%p159) target = $region28
        $region27: #{tpu_custom_call.1} parent=23 // pred_region
          %s162 = sand.u32 %s24, 1
          %s163 = scalar_lea.sflag [#allocation4], %s162
          %s164 = sand.u32 %s24, 1
          %s165 = smul.addr %s164, 32
          %s166 = scalar_lea.vmem [#allocation3], %s165
          %s167 = smul.u32 4, %s14
          %s169 = ssub.s32 512, 512
          %170 = vsyncadd %s163, %s169
          %s171 = smul.addr %s167, 128
          %s172 = scalar_lea.hbm %s0, %s171
          %s173 = sshll.u32 %s166, 4
          %s174 = int_to_ptr.vmem [resolvable:$true] %s173
          %179 = dma.hbm_to_vmem [thread:$0]  %s172, 512, %s174, %s163, 128, 128, 8
        $region28: #{tpu_custom_call.1} parent=23 // pred_fallthru
          _
        // Predicated region
        $region29: #{tpu_custom_call.1} parent=23 // pred_check
          %p180 = pneg %p60
        $region30: #{tpu_custom_call.1} parent=23 // pred_check_branch
          %182 = sbr.rel (%p180) target = $region32
        $region31: #{tpu_custom_call.1} parent=23 // pred_region
          %s183 = smul.u32 4, %s14
          %p184 = scmp.lt.s32.totalorder %s183, 15
          %s185 = scalar_select %p184, %s183, 15
          %s186 = scalar_lea.vmem %s1, %s185
          %s187 = smul.u32 4, %s14
        $region32: #{tpu_custom_call.1} parent=23 // pred_fallthru
          _
      $region24: #{tpu_custom_call.1} parent=5 // pred_fallthru
        _
      %p188 = scmp.le.s32.totalorder 1, %s14
      %p189 = scmp.lt.s32.totalorder %s14, 5
      %p190 = pnand %p188, %p189
      %p191 = pneg %p190
      // Predicated region
      $region33: #{tpu_custom_call.1} parent=5 // pred_check
        _
      $region34: #{tpu_custom_call.1} parent=5 // pred_check_branch
        %193 = sbr.rel (%p190) target = $region36
      $region35: #{tpu_custom_call.1} parent=5 // pred_region
        %s194 = ssub.s32 %s14, 1
        %s195 = sand.u32 %s27, 1
        %s196 = scalar_lea.sflag [#allocation4], %s195
        %s197 = sand.u32 %s27, 1
        %s198 = smul.addr %s197, 32
        %s199 = scalar_lea.vmem [#allocation3], %s198
        // Predicated region
        $region37: #{tpu_custom_call.1} parent=35 // pred_check
          %p200 = pneg %p40
        $region38: #{tpu_custom_call.1} parent=35 // pred_check_branch
          %202 = sbr.rel (%p200) target = $region40
        $region39: #{tpu_custom_call.1} parent=35 // pred_region
          %203 = dma.done %s196, 512
        $region40: #{tpu_custom_call.1} parent=35 // pred_fallthru
          _
        %s204 = sand.u32 %s27, 1
        %s205 = scalar_lea.sflag [#allocation4], %s204
        %s206 = sand.u32 %s27, 1
        %s207 = smul.addr %s206, 32
        %s208 = scalar_lea.vmem [#allocation3], %s207
        %p209 = pneg %p40
        %p210 = pneg %p37
        %s211 = smul.u32 4, %s19
        %p212 = scmp.lt.s32.totalorder %s211, 15
        %s213 = scalar_select %p212, %s211, 15
        %s214 = scalar_lea.vmem %s1, %s213
        %p215 = pneg %p66
        %p216 = pneg %p63
        %p217 = pneg %p87
        %p218 = pneg %p84
        %p219 = pneg %p108
        %p220 = pneg %p105
        %p221 = pneg %p134
        %p222 = pneg %p131
        %s223 = smul.u32 4, %s19
        %p224 = scmp.lt.s32.totalorder %s223, 15
        %s225 = scalar_select %p224, %s223, 15
        %s226 = scalar_lea.vmem %s4, %s225
        %s227 = smul.u32 4, %s19
        %s228 = smul.u32 4, %s19
        %p229 = scmp.lt.s32.totalorder %s228, 15
        %s230 = scalar_select %p229, %s228, 15
        %s231 = scalar_lea.vmem %s1, %s230
        %s232 = smul.u32 4, %s19
        %s233 = smul.u32 4, %s19
        %p234 = scmp.lt.s32.totalorder %s233, 15
        %s235 = scalar_select %p234, %s233, 15
        %s236 = scalar_lea.vmem %s4, %s235
        %s237 = smul.u32 4, %s19
        %v238 = vld [vmem:[%s199] sm:$0xff]
        %v239 = vld [vmem:[%s199 + $0x8] sm:$0xff]
        %v240 = vld [vmem:[%s199 + $0x10] sm:$0xff]
        %v241 = vld [vmem:[%s199 + $0x18] sm:$0xff]
        %v242 = vld [vmem:[%s2] sm:$0x1]
        %v244 = vlaneseq
        %v245 = vshrl.u32 %v244, 7
        %v246 = vsub.s32 0, %v245
        %v247 = vrot.slane %v242, %v246
        %v249 = vmul.f32 %v238, %v247
        %v250 = vmul.f32 %v239, %v247
        %v251 = vmul.f32 %v240, %v247
        %v252 = vmul.f32 %v241, %v247
        %vm253 = vcmask 261120
        %v254 = vsel %vm253, %v249, 0.0
        %255 = vadd.xlane.f32.xlu0 %v254
        %v256 = vpop.xlane.xlu0 %255
        %v257 = vsel %vm253, %v250, 0.0
        %258 = vadd.xlane.f32.xlu0 %v257
        %v259 = vpop.xlane.xlu0 %258
        %v260 = vsel %vm253, %v251, 0.0
        %261 = vadd.xlane.f32.xlu0 %v260
        %v262 = vpop.xlane.xlu0 %261
        %v263 = vsel %vm253, %v252, 0.0
        %264 = vadd.xlane.f32.xlu0 %v263
        %v265 = vpop.xlane.xlu0 %264
        %v266 = vadd.f32 %v256, 0.0
        %v267 = vadd.f32 %v259, 0.0
        %v268 = vadd.f32 %v262, 0.0
        %v269 = vadd.f32 %v265, 0.0
        %s270 = sld [smem:[#allocation2]]
        %v271 = vstv %s270
        %v272 = vadd.f32 %v266, %v271
        %v273 = vadd.f32 %v267, %v271
        %v274 = vadd.f32 %v268, %v271
        %v275 = vadd.f32 %v269, %v271
        %v276 = vld [vmem:[%s231] sm:$0x1]
        %v277 = vld [vmem:[%s231 + $0x1] sm:$0x1]
        %v278 = vld [vmem:[%s231 + $0x2] sm:$0x1]
        %v279 = vld [vmem:[%s231 + $0x3] sm:$0x1]
        %v280 = vunpack.c.0.s8 %v276
        %v281 = vunpack.c.0.s8 %v277
        %v282 = vunpack.c.0.s8 %v278
        %v283 = vunpack.c.0.s8 %v279
        %vm284 = vcmp.ne.s32.totalorder %v280, 0
        %vm285 = vcmp.ne.s32.totalorder %v281, 0
        %vm286 = vcmp.ne.s32.totalorder %v282, 0
        %vm287 = vcmp.ne.s32.totalorder %v283, 0
        %v293 = vunpack.c.l.s4 839922192
        %v294 = vunpack.c.0.s8 %v293
        %v295 = vlaneseq
        %v296 = vshrl.u32 %v295, 7
        %v297 = vsub.s32 %v294, %v296
        %v298 = vrot.slane %v272, %v297
        %v300 = vunpack.c.l.s4 1985246804
        %v301 = vunpack.c.0.s8 %v300
        %v302 = vlaneseq
        %v303 = vshrl.u32 %v302, 7
        %v304 = vsub.s32 %v301, %v303
        %v305 = vrot.slane %v272, %v304
        %v307 = vunpack.c.l.s4 839922192
        %v308 = vunpack.c.0.s8 %v307
        %v309 = vlaneseq
        %v310 = vshrl.u32 %v309, 7
        %v311 = vsub.s32 %v308, %v310
        %v312 = vrot.slane %v273, %v311
        %v314 = vunpack.c.l.s4 1985246804
        %v315 = vunpack.c.0.s8 %v314
        %v316 = vlaneseq
        %v317 = vshrl.u32 %v316, 7
        %v318 = vsub.s32 %v315, %v317
        %v319 = vrot.slane %v273, %v318
        %v321 = vunpack.c.l.s4 839922192
        %v322 = vunpack.c.0.s8 %v321
        %v323 = vlaneseq
        %v324 = vshrl.u32 %v323, 7
        %v325 = vsub.s32 %v322, %v324
        %v326 = vrot.slane %v274, %v325
        %v328 = vunpack.c.l.s4 1985246804
        %v329 = vunpack.c.0.s8 %v328
        %v330 = vlaneseq
        %v331 = vshrl.u32 %v330, 7
        %v332 = vsub.s32 %v329, %v331
        %v333 = vrot.slane %v274, %v332
        %v335 = vunpack.c.l.s4 839922192
        %v336 = vunpack.c.0.s8 %v335
        %v337 = vlaneseq
        %v338 = vshrl.u32 %v337, 7
        %v339 = vsub.s32 %v336, %v338
        %v340 = vrot.slane %v275, %v339
        %v342 = vunpack.c.l.s4 1985246804
        %v343 = vunpack.c.0.s8 %v342
        %v344 = vlaneseq
        %v345 = vshrl.u32 %v344, 7
        %v346 = vsub.s32 %v343, %v345
        %v347 = vrot.slane %v275, %v346
        %v348 = vcombine.low %v298, %v305
        %v349 = vcombine.low %v312, %v319
        %v350 = vcombine.low %v326, %v333
        %v351 = vcombine.low %v340, %v347
        %352 = vset.pattern.permute.xlu0 0
        %353 = vperm.xlu0 %352, %v348
        %v354 = vpop.permute.xlu0 %353
        %355 = vset.pattern.permute.xlu0 0
        %356 = vperm.xlu0 %355, %v349
        %v357 = vpop.permute.xlu0 %356
        %358 = vset.pattern.permute.xlu0 0
        %359 = vperm.xlu0 %358, %v350
        %v360 = vpop.permute.xlu0 %359
        %361 = vset.pattern.permute.xlu0 0
        %362 = vperm.xlu0 %361, %v351
        %v363 = vpop.permute.xlu0 %362
        %v364 = vlaneseq
        %v365 = vand.u32 %v364, 127
        %v366 = vlaneseq
        %v367 = vshrl.u32 %v366, 7
        %v368 = vsub.s32 %v365, %v367
        %v369 = vrot.slane %v354, %v368
        %v370 = vlaneseq
        %v371 = vshrl.u32 %v370, 7
        %v372 = vsub.s32 %v365, %v371
        %v373 = vrot.slane %v357, %v372
        %v374 = vlaneseq
        %v375 = vshrl.u32 %v374, 7
        %v376 = vsub.s32 %v365, %v375
        %v377 = vrot.slane %v360, %v376
        %v378 = vlaneseq
        %v379 = vshrl.u32 %v378, 7
        %v380 = vsub.s32 %v365, %v379
        %v381 = vrot.slane %v363, %v380
        %v386 = vsel %vm284, -1e+30, %v369
        %v387 = vsel %vm285, -1e+30, %v373
        %v388 = vsel %vm286, -1e+30, %v377
        %v389 = vsel %vm287, -1e+30, %v381
        %v394 = vlaneseq
        %v395 = vshrl.u32 %v394, 7
        %v396 = vsub.s32 0, %v395
        %v397 = vrot.slane %v386, %v396
        %v398 = vlaneseq
        %v399 = vshrl.u32 %v398, 7
        %v400 = vsub.s32 0, %v399
        %v401 = vrot.slane %v387, %v400
        %v402 = vlaneseq
        %v403 = vshrl.u32 %v402, 7
        %v404 = vsub.s32 0, %v403
        %v405 = vrot.slane %v388, %v404
        %v406 = vlaneseq
        %v407 = vshrl.u32 %v406, 7
        %v408 = vsub.s32 0, %v407
        %v409 = vrot.slane %v389, %v408
        %vm410 = vcmask 1041409
        %v411 = vsel %vm410, %v401, %v397
        %vm412 = vcmask 1042434
        %v413 = vsel %vm412, %v405, %v411
        %vm414 = vcmask 1043459
        %v415 = vsel %vm414, %v409, %v413
        %vm417 = vcmask 60416
        %v418 = vsel %vm417, %v415, -inf
        %419 = vmax.xlane.f32.xlu0 %v418
        %v420 = vpop.xlane.xlu0 %419
        %v423 = vunpack.c.l.s4 839922192
        %v424 = vunpack.c.0.s8 %v423
        %v425 = vlaneseq
        %v426 = vshrl.u32 %v425, 7
        %v427 = vsub.s32 %v424, %v426
        %v428 = vrot.slane %v420, %v427
        %v429 = vrot.slane %v428, 1
        %v430 = vrot.slane %v428, 2
        %v431 = vrot.slane %v428, 3
        %v436 = vsub.f32 %v386, %v428
        %v437 = vsub.f32 %v387, %v429
        %v438 = vsub.f32 %v388, %v430
        %v439 = vsub.f32 %v389, %v431
        %v440 = vmul.f32 %v436, 1.442695
        %v441 = vpow.pop %v440
        %v442 = vmul.f32 %v437, 1.442695
        %v443 = vpow.pop %v442
        %v444 = vmul.f32 %v438, 1.442695
        %v445 = vpow.pop %v444
        %v446 = vmul.f32 %v439, 1.442695
        %v447 = vpow.pop %v446
        %v452 = vlaneseq
        %v453 = vshrl.u32 %v452, 7
        %v454 = vsub.s32 0, %v453
        %v455 = vrot.slane %v441, %v454
        %v456 = vlaneseq
        %v457 = vshrl.u32 %v456, 7
        %v458 = vsub.s32 0, %v457
        %v459 = vrot.slane %v443, %v458
        %v460 = vlaneseq
        %v461 = vshrl.u32 %v460, 7
        %v462 = vsub.s32 0, %v461
        %v463 = vrot.slane %v445, %v462
        %v464 = vlaneseq
        %v465 = vshrl.u32 %v464, 7
        %v466 = vsub.s32 0, %v465
        %v467 = vrot.slane %v447, %v466
        %v468 = vsel %vm410, %v459, %v455
        %v469 = vsel %vm412, %v463, %v468
        %v470 = vsel %vm414, %v467, %v469
        %v472 = vsel %vm417, %v470, 0.0
        %473 = vadd.xlane.f32.xlu0 %v472
        %v474 = vpop.xlane.xlu0 %473
        %v475 = vrcp.pop %v474
        %v476 = vmul.f32 %v474, %v475
        %v477 = vsub.f32 2.0, %v476
        %v478 = vmul.f32 %v475, %v477
        %v481 = vunpack.c.l.s4 839922192
        %v482 = vunpack.c.0.s8 %v481
        %v483 = vlaneseq
        %v484 = vshrl.u32 %v483, 7
        %v485 = vsub.s32 %v482, %v484
        %v486 = vrot.slane %v478, %v485
        %v487 = vrot.slane %v486, 1
        %v488 = vrot.slane %v486, 2
        %v489 = vrot.slane %v486, 3
        %v494 = vmul.f32 %v441, %v486
        %v495 = vmul.f32 %v443, %v487
        %v496 = vmul.f32 %v445, %v488
        %v497 = vmul.f32 %v447, %v489
        %vm498 = vcmask 57344
        %499 = vst.msk [vmem:[%s236] sm:$0x1] %vm498, %v494
        %500 = vst.msk [vmem:[%s236 + $0x1] sm:$0x1] %vm498, %v495
        %501 = vst.msk [vmem:[%s236 + $0x2] sm:$0x1] %vm498, %v496
        %502 = vst.msk [vmem:[%s236 + $0x3] sm:$0x1] %vm498, %v497
        %s503 = smul.u32 4, %s19
        %p504 = scmp.lt.s32.totalorder %s503, 15
        %s505 = scalar_select %p504, %s503, 15
        %s506 = scalar_lea.vmem %s4, %s505
        // Predicated region
        $region41: #{tpu_custom_call.1} parent=35 // pred_check
          %p507 = pneg %p131
        $region42: #{tpu_custom_call.1} parent=35 // pred_check_branch
          %509 = sbr.rel (%p507) target = $region44
        $region43: #{tpu_custom_call.1} parent=35 // pred_region
          %s510 = smul.u32 4, %s19
        $region44: #{tpu_custom_call.1} parent=35 // pred_fallthru
          _
      $region36: #{tpu_custom_call.1} parent=5 // pred_fallthru
        _
      %p511 = scmp.le.s32.totalorder 2, %s14
      // Predicated region
      $region45: #{tpu_custom_call.1} parent=5 // pred_check
        %p512 = pneg %p511
      $region46: #{tpu_custom_call.1} parent=5 // pred_check_branch
        %514 = sbr.rel (%p512) target = $region48
      $region47: #{tpu_custom_call.1} parent=5 // pred_region
        %s515 = ssub.s32 %s14, 2
        // Predicated region
        $region49: #{tpu_custom_call.1} parent=47 // pred_check
          %p516 = pneg %p137
        $region50: #{tpu_custom_call.1} parent=47 // pred_check_branch
          %518 = sbr.rel (%p516) target = $region52
        $region51: #{tpu_custom_call.1} parent=47 // pred_region
          %s519 = smul.u32 4, %s20
          %p520 = scmp.lt.s32.totalorder %s519, 15
          %s521 = scalar_select %p520, %s519, 15
          %s522 = scalar_lea.vmem %s4, %s521
        $region52: #{tpu_custom_call.1} parent=47 // pred_fallthru
          _
      $region48: #{tpu_custom_call.1} parent=5 // pred_fallthru
        _
    $region6: #{tpu_custom_call.1} parent=1 // loop_footer
      %s18 = sadd.s32 1, %s14
    $region7: #{tpu_custom_call.1} parent=1 // loop_footer_branch
      %13 = sbr.rel target = $region3
    $region8: #{tpu_custom_call.1} parent=1 // loop_exit
      _
    %523 = vsyncpa [#allocation4], 1
    %s524 = scalar_lea.sflag [#allocation4], 1
    %525 = vsyncpa %s524, 1

</llo_original>
